<compile_context>
chip_gen: v6e
topology: v6e:2x2x1
jax: 0.10.0
libtpu: 0.0.40
codegen_flags: <defaults>
</compile_context>

<pallas_src>
import jax
import jax.numpy as jnp
from jax import lax
from jax.experimental import pallas as pl
from jax.experimental.pallas import tpu as pltpu


def _triplet_kernel(xr_ref, xct_ref, hr_ref, hc_ref, lr_ref, lc_ref,
                    out_ref, max_sc, min_sc):
    i = pl.program_id(0)
    j = pl.program_id(1)
    nj = pl.num_programs(1)

    @pl.when(j == 0)
    def _():
        max_sc[...] = jnp.full_like(max_sc, -jnp.inf)
        min_sc[...] = jnp.full_like(min_sc, jnp.inf)

    xr = xr_ref[...]                      # (TR, D)   native matmul dtype
    xct = xct_ref[...]                    # (D, TC)   native matmul dtype
    tr = xr.shape[0]
    tc = xct.shape[1]

    # Standard A @ B on the MXU (column operand pre-transposed in the wrapper).
    gram = lax.dot_general(xr, xct, (((1,), (0,)), ((), ())),
                           preferred_element_type=jnp.float32)    # (TR, TC)

    # Half squared distances: hr + hc - gram == (||a||^2 + ||b||^2 - 2 a.b) / 2.
    # Norms are pre-halved in the wrapper; max/min ordering is unchanged.
    col_off = pl.multiple_of(j * tc, 128)
    hc = hc_ref[:, pl.ds(col_off, tc)]                            # (1, TC)
    lc = lc_ref[:, pl.ds(col_off, tc)]                            # (1, TC)
    h2 = hr_ref[...] + hc - gram                                  # (TR, TC)

    # Diagonal mask from two small iotas + one broadcast compare.
    ri = lax.broadcasted_iota(jnp.int32, (tr, 1), 0) + (i * tr - j * tc)
    ci = lax.broadcasted_iota(jnp.int32, (1, tc), 1)
    diag = ri == ci                                               # (TR, TC)

    same = lr_ref[...] == lc                                      # (TR, TC)
    pos_mask = jnp.logical_and(same, jnp.logical_not(diag))
    neg_mask = jnp.logical_not(same)

    ninf = jnp.float32(-jnp.inf)
    pinf = jnp.float32(jnp.inf)
    max_sc[...] = jnp.maximum(
        max_sc[...], jnp.max(jnp.where(pos_mask, h2, ninf), axis=1, keepdims=True))
    min_sc[...] = jnp.minimum(
        min_sc[...], jnp.min(jnp.where(neg_mask, h2, pinf), axis=1, keepdims=True))

    @pl.when(j == nj - 1)
    def _():
        ap2 = max_sc[...] * 2.0           # back to squared distances (TR, 1)
        an2 = min_sc[...] * 2.0
        # Clamp tiny negative rounding only on the (TR,1) accumulators; rows with
        # no valid positive stay exactly -inf (explicit check -> no NaN).
        ap = jnp.where(ap2 == ninf, ninf, jnp.sqrt(jnp.maximum(ap2, 0.0)))
        an = jnp.sqrt(jnp.maximum(an2, 0.0))
        z = ap - an
        # SoftMarginLoss with target y = 1 on (an - ap): log(1 + exp(-(an - ap))).
        out_ref[...] = jnp.maximum(z, 0.0) + jnp.log1p(jnp.exp(-jnp.abs(z)))


def _footprint(tr, tc, d, eb, n_pad):
    """Rough VMEM bytes for one grid step (double-buffered inputs + temporaries)."""
    return (2 * tr * d * eb                 # row embed tile (double-buffered)
            + 2 * d * tc * eb               # col embed tile (double-buffered)
            + 6 * tr * tc * 4               # gram / h2 / mask / select temporaries
            + 3 * 2 * tr * 128 * 4          # (TR,1) norm/label/out blocks (lane-padded)
            + 2 * 2 * 8 * n_pad * 4)        # resident (1,N) col norm/label (sublane-padded)


def _select_tiles(n_pad, d, eb, budget):
    """Largest (TR, TC) that fits the budget; keep >= 2 row blocks for megacore."""
    tr_cands = [t for t in (1024, 512, 256, 128, 64, 32, 16, 8)
                if t <= n_pad // 2 and n_pad % t == 0]
    if not tr_cands:
        tr_cands = [8]
    tc_cands = [t for t in (2048, 1024, 512, 256, 128)
                if t <= n_pad and n_pad % t == 0]
    best = None
    for tr in tr_cands:
        for tc in tc_cands:
            if _footprint(tr, tc, d, eb, n_pad) > budget:
                continue
            key = (tr * tc, tr)             # maximize area, tie-break larger TR
            if best is None or key > best[0]:
                best = (key, (tr, tc))
    return best[1] if best is not None else (8, 128)


def triplet_loss_batch_hard(embeds, labels, *, use_bf16_matmul=False):
    """embeds: (N, D) float; labels: (N,) int. Returns scalar f32 loss."""
    n, d = embeds.shape
    n_pad = ((n + 127) // 128) * 128

    e32 = embeds.astype(jnp.float32)
    half_sq = 0.5 * jnp.sum(e32 * e32, axis=1)          # (N,)
    lbl = labels.astype(jnp.int32)

    if n_pad != n:
        pad = n_pad - n
        e32 = jnp.pad(e32, ((0, pad), (0, 0)))
        # Pad columns: +inf half-norm -> d2 = +inf, never the hardest negative;
        # sentinel label (< every real label) -> never a positive.  Pad rows are
        # dropped from the final mean.
        half_sq = jnp.concatenate(
            [half_sq, jnp.full((pad,), jnp.inf, jnp.float32)])
        sentinel = lbl.min() - jnp.int32(1)
        lbl = jnp.concatenate([lbl, jnp.full((pad,), sentinel, jnp.int32)])

    if embeds.dtype == jnp.bfloat16 or use_bf16_matmul:
        mat_dtype = jnp.bfloat16            # bf16-native MXU on v5e/v6e/v7x
    else:
        mat_dtype = jnp.float32
    x_rows = e32.astype(mat_dtype)          # (N_pad, D)
    x_cols_t = x_rows.T                     # (D, N_pad) -- transposed once, in XLA

    hr_col = half_sq.reshape(n_pad, 1)
    hc_row = half_sq.reshape(1, n_pad)
    lr_col = lbl.reshape(n_pad, 1)
    lc_row = lbl.reshape(1, n_pad)

    eb = 2 if mat_dtype == jnp.bfloat16 else 4
    try:
        vmem_cap = int(pltpu.get_tpu_info().vmem_capacity_bytes)
    except Exception:
        vmem_cap = 64 << 20                 # conservative (v7x per-core VMEM)
    vmem_limit = min(int(vmem_cap * 0.85), 110 << 20)
    budget = int(vmem_limit * 0.85)
    tr, tc = _select_tiles(n_pad, d, eb, budget)

    per_row = pl.pallas_call(
        _triplet_kernel,
        out_shape=jax.ShapeDtypeStruct((n_pad, 1), jnp.float32),
        grid_spec=pltpu.PrefetchScalarGridSpec(
            num_scalar_prefetch=0,
            grid=(n_pad // tr, n_pad // tc),
            in_specs=[
                pl.BlockSpec((tr, d), lambda i, j: (i, 0)),       # row embed tile
                pl.BlockSpec((d, tc), lambda i, j: (0, j)),       # col embed tile (pre-T)
                pl.BlockSpec((tr, 1), lambda i, j: (i, 0)),       # half row norms
                pl.BlockSpec((1, n_pad), lambda i, j: (0, 0)),    # half col norms (resident)
                pl.BlockSpec((tr, 1), lambda i, j: (i, 0)),       # row labels
                pl.BlockSpec((1, n_pad), lambda i, j: (0, 0)),    # col labels (resident)
            ],
            out_specs=pl.BlockSpec((tr, 1), lambda i, j: (i, 0)),
            scratch_shapes=[
                pltpu.VMEM((tr, 1), jnp.float32),   # running max of d2/2 (positives)
                pltpu.VMEM((tr, 1), jnp.float32),   # running min of d2/2 (negatives)
            ],
        ),
        compiler_params=pltpu.CompilerParams(
            dimension_semantics=("parallel", "arbitrary"),
            vmem_limit_bytes=vmem_limit),
    )(x_rows, x_cols_t, hr_col, hc_row, lr_col, lc_row)

    return jnp.mean(per_row[:n, 0])


def _reference_loss(embeds, labels):
    """Pure-JAX reference of the same forward pass (for self-check)."""
    e = embeds.astype(jnp.float32)
    d2 = jnp.sum((e[:, None, :] - e[None, :, :]) ** 2, axis=-1)
    dist = jnp.sqrt(jnp.maximum(d2, 0.0))
    same = labels[:, None] == labels[None, :]
    eye = jnp.eye(e.shape[0], dtype=bool)
    pos_mask = same & ~eye
    neg_mask = ~same
    ap = jnp.max(jnp.where(pos_mask, dist, -jnp.inf), axis=1)
    an = jnp.min(jnp.where(neg_mask, dist, jnp.inf), axis=1)
    z = ap - an
    return jnp.mean(jnp.maximum(z, 0.0) + jnp.log1p(jnp.exp(-jnp.abs(z))))


if __name__ == "__main__":
    key = jax.random.PRNGKey(0)
    k1, k2, k3 = jax.random.split(key, 3)

    # Primary (small) test -- exercises the N-padding path (N=8 -> 128).
    N, D = 8, 32
    embeds = jax.random.normal(k1, (N, D), dtype=jnp.float32)
    labels = jnp.array([0, 0, 1, 1, 2, 2, 3, 3], dtype=jnp.int32)
    loss = jax.block_until_ready(triplet_loss_batch_hard(embeds, labels))
    ref = _reference_loss(embeds, labels)
    assert jnp.allclose(loss, ref, rtol=1e-5, atol=1e-5), (loss, ref)

    # Awkward N: padding + multi-block (row, col) grid + resident pl.ds slicing.
    N2, D2 = 300, 32
    embeds2 = jax.random.normal(k2, (N2, D2), dtype=jnp.float32)
    labels2 = (jnp.arange(N2, dtype=jnp.int32) // 2)
    loss2 = jax.block_until_ready(triplet_loss_batch_hard(embeds2, labels2))
    ref2 = _reference_loss(embeds2, labels2)
    assert jnp.allclose(loss2, ref2, rtol=1e-3, atol=1e-3), (loss2, ref2)

    # Larger aligned case -- multiple row blocks (megacore) + big column tile.
    N3, D3 = 1024, 32
    embeds3 = jax.random.normal(k3, (N3, D3), dtype=jnp.float32)
    labels3 = jnp.repeat(jnp.arange(N3 // 2, dtype=jnp.int32), 2)
    loss3 = jax.block_until_ready(triplet_loss_batch_hard(embeds3, labels3))
    ref3 = _reference_loss(embeds3, labels3)
    assert jnp.allclose(loss3, ref3, rtol=1e-3, atol=1e-3), (loss3, ref3)

    print("KERNEL_OK")
</pallas_src>

<mosaic_0001>
module attributes {stable_mosaic.version = 11 : i64} {
  func.func @_triplet_kernel(%arg0: i32, %arg1: i32, %arg2: memref<64x32xf32, #tpu.memory_space<vmem>>, %arg3: memref<32x128xf32, #tpu.memory_space<vmem>>, %arg4: memref<64x1xf32, #tpu.memory_space<vmem>>, %arg5: memref<1x128xf32, #tpu.memory_space<vmem>>, %arg6: memref<64x1xi32, #tpu.memory_space<vmem>>, %arg7: memref<1x128xi32, #tpu.memory_space<vmem>>, %arg8: memref<64x1xf32, #tpu.memory_space<vmem>>, %arg9: memref<64x1xf32, #tpu.memory_space<vmem>>, %arg10: memref<64x1xf32, #tpu.memory_space<vmem>>) attributes {dimension_semantics = [#tpu.dimension_semantics<parallel>, #tpu.dimension_semantics<arbitrary>], iteration_bounds = array<i64: 2, 1>, scalar_prefetch = 0 : i64, scratch_operands = 2 : i64, tpu.core_type = #tpu.core_type<tc>, window_params = [{transform_indices = @transform_0, window_bounds = array<i64: 64, 32>}, {transform_indices = @transform_1, window_bounds = array<i64: 32, 128>}, {transform_indices = @transform_2, window_bounds = array<i64: 64, 1>}, {pipeline_mode = #tpu.pipeline_mode<synchronous>, transform_indices = @transform_3, window_bounds = array<i64: 1, 128>}, {transform_indices = @transform_4, window_bounds = array<i64: 64, 1>}, {pipeline_mode = #tpu.pipeline_mode<synchronous>, transform_indices = @transform_5, window_bounds = array<i64: 1, 128>}, {transform_indices = @transform_6, window_bounds = array<i64: 64, 1>}]} {
    %c0_i32 = arith.constant 0 : i32
    %0 = arith.cmpi eq, %arg1, %c0_i32 : i32
    %1 = arith.extui %0 : i1 to i32
    %c0_i32_0 = arith.constant 0 : i32
    %2 = arith.cmpi ne, %1, %c0_i32_0 : i32
    scf.if %2 {
      %cst_28 = arith.constant 0xFF800000 : f32
      %51 = vector.broadcast %cst_28 : f32 to vector<64x1xf32>
      %c0_29 = arith.constant 0 : index
      %c0_30 = arith.constant 0 : index
      %52 = vector.load %arg9[%c0_29, %c0_30] : memref<64x1xf32, #tpu.memory_space<vmem>>, vector<64x1xf32>
      tpu.vector_store %arg9[%c0_29, %c0_30], %51 {strides = array<i32>} : memref<64x1xf32, #tpu.memory_space<vmem>>, vector<64x1xf32>,
      %cst_31 = arith.constant 0x7F800000 : f32
      %53 = vector.broadcast %cst_31 : f32 to vector<64x1xf32>
      %c0_32 = arith.constant 0 : index
      %c0_33 = arith.constant 0 : index
      %54 = vector.load %arg10[%c0_32, %c0_33] : memref<64x1xf32, #tpu.memory_space<vmem>>, vector<64x1xf32>
      tpu.vector_store %arg10[%c0_32, %c0_33], %53 {strides = array<i32>} : memref<64x1xf32, #tpu.memory_space<vmem>>, vector<64x1xf32>,
    } else {
    }
    %c0 = arith.constant 0 : index
    %c0_1 = arith.constant 0 : index
    %3 = vector.load %arg2[%c0, %c0_1] : memref<64x32xf32, #tpu.memory_space<vmem>>, vector<64x32xf32>
    %c0_2 = arith.constant 0 : index
    %c0_3 = arith.constant 0 : index
    %4 = vector.load %arg3[%c0_2, %c0_3] : memref<32x128xf32, #tpu.memory_space<vmem>>, vector<32x128xf32>
    %cst = arith.constant dense<0.000000e+00> : vector<64x128xf32>
    %5 = tpu.matmul %3, %4, %cst {dimension_numbers = #tpu.dot_dimension_numbers<[1], [0], [0], [1], [0, 0, 1, 1], [], []>} : vector<64x32xf32>, vector<32x128xf32>, vector<64x128xf32> -> vector<64x128xf32>
    %c128_i32 = arith.constant 128 : i32
    %6 = arith.muli %arg1, %c128_i32 : i32
    %7 = tpu.assume_multiple %6, 128 : i32
    %c0_4 = arith.constant 0 : index
    %8 = arith.index_cast %7 : i32 to index
    %9 = vector.load %arg5[%c0_4, %8] : memref<1x128xf32, #tpu.memory_space<vmem>>, vector<1x128xf32>
    %c0_5 = arith.constant 0 : index
    %10 = arith.index_cast %7 : i32 to index
    %11 = vector.load %arg7[%c0_5, %10] : memref<1x128xi32, #tpu.memory_space<vmem>>, vector<1x128xi32>
    %c0_6 = arith.constant 0 : index
    %c0_7 = arith.constant 0 : index
    %12 = vector.load %arg4[%c0_6, %c0_7] : memref<64x1xf32, #tpu.memory_space<vmem>>, vector<64x1xf32>
    %13 = vector.broadcast %12 : vector<64x1xf32> to vector<64x128xf32>
    %14 = vector.broadcast %9 : vector<1x128xf32> to vector<64x128xf32>
    %15 = arith.addf %13, %14 : vector<64x128xf32>
    %16 = arith.subf %15, %5 : vector<64x128xf32>
    %17 = tpu.iota {dimensions = array<i32: 0>} : vector<64x1xi32>
    %c64_i32 = arith.constant 64 : i32
    %18 = arith.muli %arg0, %c64_i32 : i32
    %c128_i32_8 = arith.constant 128 : i32
    %19 = arith.muli %arg1, %c128_i32_8 : i32
    %20 = arith.subi %18, %19 : i32
    %21 = vector.broadcast %20 : i32 to vector<64x1xi32>
    %22 = arith.addi %17, %21 : vector<64x1xi32>
    %23 = tpu.iota {dimensions = array<i32: 1>} : vector<1x128xi32>
    %24 = vector.broadcast %22 : vector<64x1xi32> to vector<64x128xi32>
    %25 = vector.broadcast %23 : vector<1x128xi32> to vector<64x128xi32>
    %26 = arith.cmpi eq, %24, %25 : vector<64x128xi32>
    %c0_9 = arith.constant 0 : index
    %c0_10 = arith.constant 0 : index
    %27 = vector.load %arg6[%c0_9, %c0_10] : memref<64x1xi32, #tpu.memory_space<vmem>>, vector<64x1xi32>
    %28 = vector.broadcast %27 : vector<64x1xi32> to vector<64x128xi32>
    %29 = vector.broadcast %11 : vector<1x128xi32> to vector<64x128xi32>
    %30 = arith.cmpi eq, %28, %29 : vector<64x128xi32>
    %cst_11 = arith.constant dense<true> : vector<64x128xi1>
    %31 = arith.xori %26, %cst_11 : vector<64x128xi1>
    %32 = arith.andi %30, %31 : vector<64x128xi1>
    %cst_12 = arith.constant dense<true> : vector<64x128xi1>
    %33 = arith.xori %30, %cst_12 : vector<64x128xi1>
    %c0_13 = arith.constant 0 : index
    %c0_14 = arith.constant 0 : index
    %34 = vector.load %arg9[%c0_13, %c0_14] : memref<64x1xf32, #tpu.memory_space<vmem>>, vector<64x1xf32>
    %cst_15 = arith.constant 0xFF800000 : f32
    %35 = vector.broadcast %cst_15 : f32 to vector<64x128xf32>
    %36 = arith.select %32, %16, %35 : vector<64x128xi1>, vector<64x128xf32>
    %cst_16 = arith.constant dense<0xFF800000> : vector<64xf32>
    %37 = vector.multi_reduction <maximumf>, %36, %cst_16 [1] : vector<64x128xf32> to vector<64xf32>
    %38 = vector.shape_cast %37 : vector<64xf32> to vector<64x1xf32>
    %39 = arith.maximumf %34, %38 : vector<64x1xf32>
    %c0_17 = arith.constant 0 : index
    %c0_18 = arith.constant 0 : index
    %40 = vector.load %arg9[%c0_17, %c0_18] : memref<64x1xf32, #tpu.memory_space<vmem>>, vector<64x1xf32>
    tpu.vector_store %arg9[%c0_17, %c0_18], %39 {strides = array<i32>} : memref<64x1xf32, #tpu.memory_space<vmem>>, vector<64x1xf32>,
    %c0_19 = arith.constant 0 : index
    %c0_20 = arith.constant 0 : index
    %41 = vector.load %arg10[%c0_19, %c0_20] : memref<64x1xf32, #tpu.memory_space<vmem>>, vector<64x1xf32>
    %cst_21 = arith.constant 0x7F800000 : f32
    %42 = vector.broadcast %cst_21 : f32 to vector<64x128xf32>
    %43 = arith.select %33, %16, %42 : vector<64x128xi1>, vector<64x128xf32>
    %cst_22 = arith.constant dense<0x7F800000> : vector<64xf32>
    %44 = vector.multi_reduction <minimumf>, %43, %cst_22 [1] : vector<64x128xf32> to vector<64xf32>
    %45 = vector.shape_cast %44 : vector<64xf32> to vector<64x1xf32>
    %46 = arith.minimumf %41, %45 : vector<64x1xf32>
    %c0_23 = arith.constant 0 : index
    %c0_24 = arith.constant 0 : index
    %47 = vector.load %arg10[%c0_23, %c0_24] : memref<64x1xf32, #tpu.memory_space<vmem>>, vector<64x1xf32>
    tpu.vector_store %arg10[%c0_23, %c0_24], %46 {strides = array<i32>} : memref<64x1xf32, #tpu.memory_space<vmem>>, vector<64x1xf32>,
    %c0_i32_25 = arith.constant 0 : i32
    %48 = arith.cmpi eq, %arg1, %c0_i32_25 : i32
    %49 = arith.extui %48 : i1 to i32
    %cst_26 = arith.constant 0xFF800000 : f32
    %c0_i32_27 = arith.constant 0 : i32
    %50 = arith.cmpi ne, %49, %c0_i32_27 : i32
    scf.if %50 {
      %c0_28 = arith.constant 0 : index
      %c0_29 = arith.constant 0 : index
      %51 = vector.load %arg9[%c0_28, %c0_29] : memref<64x1xf32, #tpu.memory_space<vmem>>, vector<64x1xf32>
      %cst_30 = arith.constant 2.000000e+00 : f32
      %52 = vector.broadcast %cst_30 : f32 to vector<64x1xf32>
      %53 = arith.mulf %51, %52 : vector<64x1xf32>
      %c0_31 = arith.constant 0 : index
      %c0_32 = arith.constant 0 : index
      %54 = vector.load %arg10[%c0_31, %c0_32] : memref<64x1xf32, #tpu.memory_space<vmem>>, vector<64x1xf32>
      %cst_33 = arith.constant 2.000000e+00 : f32
      %55 = vector.broadcast %cst_33 : f32 to vector<64x1xf32>
      %56 = arith.mulf %54, %55 : vector<64x1xf32>
      %57 = vector.broadcast %cst_26 : f32 to vector<64x1xf32>
      %58 = arith.cmpf oeq, %53, %57 : vector<64x1xf32>
      %cst_34 = arith.constant 0.000000e+00 : f32
      %59 = vector.broadcast %cst_34 : f32 to vector<64x1xf32>
      %60 = arith.maximumf %53, %59 : vector<64x1xf32>
      %61 = math.sqrt %60 : vector<64x1xf32>
      %62 = vector.broadcast %cst_26 : f32 to vector<64x1xf32>
      %63 = arith.select %58, %62, %61 : vector<64x1xi1>, vector<64x1xf32>
      %cst_35 = arith.constant 0.000000e+00 : f32
      %64 = vector.broadcast %cst_35 : f32 to vector<64x1xf32>
      %65 = arith.maximumf %56, %64 : vector<64x1xf32>
      %66 = math.sqrt %65 : vector<64x1xf32>
      %67 = arith.subf %63, %66 : vector<64x1xf32>
      %cst_36 = arith.constant 0.000000e+00 : f32
      %68 = vector.broadcast %cst_36 : f32 to vector<64x1xf32>
      %69 = arith.maximumf %67, %68 : vector<64x1xf32>
      %70 = math.absf %67 : vector<64x1xf32>
      %cst_37 = arith.constant 0.000000e+00 : f32
      %71 = vector.broadcast %cst_37 : f32 to vector<64x1xf32>
      %72 = arith.subf %71, %70 : vector<64x1xf32>
      %73 = math.exp %72 : vector<64x1xf32>
      %74 = math.log1p %73 : vector<64x1xf32>
      %75 = arith.addf %69, %74 : vector<64x1xf32>
      %c0_38 = arith.constant 0 : index
      %c0_39 = arith.constant 0 : index
      %76 = vector.load %arg8[%c0_38, %c0_39] : memref<64x1xf32, #tpu.memory_space<vmem>>, vector<64x1xf32>
      tpu.vector_store %arg8[%c0_38, %c0_39], %75 {strides = array<i32>} : memref<64x1xf32, #tpu.memory_space<vmem>>, vector<64x1xf32>,
    } else {
    }
    return
  }
  func.func @transform_0(%arg0: i32, %arg1: i32) -> (i32, i32) {
    %c0_i32 = arith.constant 0 : i32
    %c0_i32_0 = arith.constant 0 : i32
    return %arg0, %c0_i32 : i32, i32
  }
  func.func @transform_1(%arg0: i32, %arg1: i32) -> (i32, i32) {
    %c0_i32 = arith.constant 0 : i32
    %c0_i32_0 = arith.constant 0 : i32
    return %c0_i32, %arg1 : i32, i32
  }
  func.func @transform_2(%arg0: i32, %arg1: i32) -> (i32, i32) {
    %c0_i32 = arith.constant 0 : i32
    %c0_i32_0 = arith.constant 0 : i32
    return %arg0, %c0_i32 : i32, i32
  }
  func.func @transform_3(%arg0: i32, %arg1: i32) -> (i32, i32) {
    %c0_i32 = arith.constant 0 : i32
    %c0_i32_0 = arith.constant 0 : i32
    %c0_i32_1 = arith.constant 0 : i32
    return %c0_i32, %c0_i32_0 : i32, i32
  }
  func.func @transform_4(%arg0: i32, %arg1: i32) -> (i32, i32) {
    %c0_i32 = arith.constant 0 : i32
    %c0_i32_0 = arith.constant 0 : i32
    return %arg0, %c0_i32 : i32, i32
  }
  func.func @transform_5(%arg0: i32, %arg1: i32) -> (i32, i32) {
    %c0_i32 = arith.constant 0 : i32
    %c0_i32_0 = arith.constant 0 : i32
    %c0_i32_1 = arith.constant 0 : i32
    return %c0_i32, %c0_i32_0 : i32, i32
  }
  func.func @transform_6(%arg0: i32, %arg1: i32) -> (i32, i32) {
    %c0_i32 = arith.constant 0 : i32
    %c0_i32_0 = arith.constant 0 : i32
    return %arg0, %c0_i32 : i32, i32
  }
}

</mosaic_0001>

<llo_original>
// kernel: tpu_custom_call.1
$region0: #{tpu_custom_call.1}
  #allocation0 [shape = 'u32[]', space=smem, size = 0x4, offset = 0x4, fixed_abs, tag = 'smem constant byte address 0x4 - core index']
  #allocation1 [shape = 'u32[144,128]{1,0:T(1,128)}', space=vmem, size = 0x12000, scoped, tag = 'internal scratch']
  #allocation2 [shape = 'f32[64,1]{1,0:T(8,128)}', space=vmem, size = 0x8000, scoped, tag = 'scratch operand']
  #allocation3 [shape = 'f32[64,1]{1,0:T(8,128)}', space=vmem, size = 0x8000, scoped, tag = 'scratch operand']
  %s0 = inlined_call_operand.vmem [shape: f32[128,32], index: 0, kind: input, shape index: {}]
  %s1 = inlined_call_operand.vmem [shape: f32[32,128], index: 1, kind: input, shape index: {}]
  %s2 = inlined_call_operand.vmem [shape: f32[128,1], index: 2, kind: input, shape index: {}]
  %s3 = inlined_call_operand.vmem [shape: f32[1,128], index: 3, kind: input, shape index: {}]
  %s4 = inlined_call_operand.vmem [shape: s32[128,1], index: 4, kind: input, shape index: {}]
  %s5 = inlined_call_operand.vmem [shape: s32[1,128], index: 5, kind: input, shape index: {}]
  %s6 = inlined_call_operand.vmem [shape: f32[128,1], index: 6, kind: output, shape index: {}]
  %s7 = sld [smem:[#allocation0]]
  $region65: #{tpu_custom_call.1} parent=0
    _
  %s9 = ssub.s32 1, %s7
  %s10 = scalar_select 0, %s9, %s7
  loop: start=0, step=1, limit=4
  $region2: #{tpu_custom_call.1} parent=0 // loop_pre_header
    _
  $region3: #{tpu_custom_call.1} parent=0 // loop_header
    %s12 = sphi 0, %s16
    %p13 = scmp.ge.s32.totalorder %s12, 4
    %s19 = sphi 0, %s31
    %s20 = sphi 0, %s27
    %s21 = sphi 0, %s19
    %s22 = sphi 0, %s20
    %s23 = sphi 0, %s21
    %s24 = sphi 0, %s22
    %s34 = sphi 0, %s36
    %s37 = sphi 0, %s34
    %s38 = sphi 0, %s37
    %s54 = sphi 0, %s38
    %s60 = sphi 0, %s62
    %s63 = sphi 0, %s60
    %s64 = sphi 0, %s63
    %s80 = sphi 0, %s64
    %s86 = sphi 0, %s88
    %s89 = sphi 0, %s86
    %s90 = sphi 0, %s89
    %s106 = sphi 0, %s90
    %s110 = sphi 0, %s110
    %s112 = sphi 0, %s110
    %s113 = sphi 0, %s112
    %s127 = sphi 0, %s113
    %s133 = sphi 0, %s135
    %s136 = sphi 0, %s133
    %s137 = sphi 0, %s136
    %s153 = sphi 0, %s137
    %s157 = sphi 0, %s157
    %s159 = sphi 0, %s157
    %s160 = sphi 0, %s159
    %s174 = sphi 0, %s160
    %s180 = sphi 0, %s182
    %s183 = sphi 0, %s180
    %s184 = sphi 0, %s183
    %s200 = sphi 0, %s184
  $region4: #{tpu_custom_call.1} parent=0 // loop_header_branch
    %15 = sbr.rel (%p13) target = $region8
  $region5: #{tpu_custom_call.1} parent=0 // loop_body
    %s17 = ssub.s32 %s12, 1
    %s18 = ssub.s32 %s12, 2
    %s25 = sadd.s32 1, %s20
    %p26 = scmp.ge.s32.totalorder %s25, 1
    %s27 = scalar_select %p26, 0, %s25
    %s28 = sadd.s32 1, %s19
    %s29 = scalar_select %p26, %s28, %s19
    %p30 = scmp.ge.s32.totalorder %s29, 2
    %s31 = scalar_select %p30, 0, %s29
    %s32 = ssub.s32 %s19, %s31
    %p33 = scmp.eq.s32.totalorder %s32, 0
    %s35 = sadd.s32 %s34, 1
    %s36 = scalar_select %p33, %s34, %s35
    %p39 = pneg %p33
    %p40 = scmp.eq.s32.totalorder %s12, 1
    %p41 = por %p39, %p40
    %p42 = scmp.ne.s32.totalorder %s34, %s37
    %p43 = scmp.eq.s32.totalorder %s12, 0
    %p44 = por %p42, %p43
    %p45 = scmp.ne.s32.totalorder %s34, %s37
    %p46 = scmp.eq.s32.totalorder %s17, 1
    %p47 = por %p45, %p46
    %p48 = scmp.ne.s32.totalorder %s37, %s38
    %p49 = scmp.eq.s32.totalorder %s17, 0
    %p50 = por %p48, %p49
    %p51 = scmp.ne.s32.totalorder %s37, %s38
    %p52 = scmp.eq.s32.totalorder %s18, 1
    %p53 = por %p51, %p52
    %p55 = scmp.ne.s32.totalorder %s38, %s54
    %p56 = scmp.eq.s32.totalorder %s18, 0
    %p57 = por %p55, %p56
    %s58 = ssub.s32 %s20, %s27
    %p59 = scmp.eq.s32.totalorder %s58, 0
    %s61 = sadd.s32 %s60, 1
    %s62 = scalar_select %p59, %s60, %s61
    %p65 = pneg %p59
    %p66 = scmp.eq.s32.totalorder %s12, 1
    %p67 = por %p65, %p66
    %p68 = scmp.ne.s32.totalorder %s60, %s63
    %p69 = scmp.eq.s32.totalorder %s12, 0
    %p70 = por %p68, %p69
    %p71 = scmp.ne.s32.totalorder %s60, %s63
    %p72 = scmp.eq.s32.totalorder %s17, 1
    %p73 = por %p71, %p72
    %p74 = scmp.ne.s32.totalorder %s63, %s64
    %p75 = scmp.eq.s32.totalorder %s17, 0
    %p76 = por %p74, %p75
    %p77 = scmp.ne.s32.totalorder %s63, %s64
    %p78 = scmp.eq.s32.totalorder %s18, 1
    %p79 = por %p77, %p78
    %p81 = scmp.ne.s32.totalorder %s64, %s80
    %p82 = scmp.eq.s32.totalorder %s18, 0
    %p83 = por %p81, %p82
    %s84 = ssub.s32 %s19, %s31
    %p85 = scmp.eq.s32.totalorder %s84, 0
    %s87 = sadd.s32 %s86, 1
    %s88 = scalar_select %p85, %s86, %s87
    %p91 = pneg %p85
    %p92 = scmp.eq.s32.totalorder %s12, 1
    %p93 = por %p91, %p92
    %p94 = scmp.ne.s32.totalorder %s86, %s89
    %p95 = scmp.eq.s32.totalorder %s12, 0
    %p96 = por %p94, %p95
    %p97 = scmp.ne.s32.totalorder %s86, %s89
    %p98 = scmp.eq.s32.totalorder %s17, 1
    %p99 = por %p97, %p98
    %p100 = scmp.ne.s32.totalorder %s89, %s90
    %p101 = scmp.eq.s32.totalorder %s17, 0
    %p102 = por %p100, %p101
    %p103 = scmp.ne.s32.totalorder %s89, %s90
    %p104 = scmp.eq.s32.totalorder %s18, 1
    %p105 = por %p103, %p104
    %p107 = scmp.ne.s32.totalorder %s90, %s106
    %p108 = scmp.eq.s32.totalorder %s18, 0
    %p109 = por %p107, %p108
    %s111 = sadd.s32 %s110, 1
    %p114 = scmp.eq.s32.totalorder %s12, 1
    %p115 = scmp.ne.s32.totalorder %s110, %s112
    %p116 = scmp.eq.s32.totalorder %s12, 0
    %p117 = por %p115, %p116
    %p118 = scmp.ne.s32.totalorder %s110, %s112
    %p119 = scmp.eq.s32.totalorder %s17, 1
    %p120 = por %p118, %p119
    %p121 = scmp.ne.s32.totalorder %s112, %s113
    %p122 = scmp.eq.s32.totalorder %s17, 0
    %p123 = por %p121, %p122
    %p124 = scmp.ne.s32.totalorder %s112, %s113
    %p125 = scmp.eq.s32.totalorder %s18, 1
    %p126 = por %p124, %p125
    %p128 = scmp.ne.s32.totalorder %s113, %s127
    %p129 = scmp.eq.s32.totalorder %s18, 0
    %p130 = por %p128, %p129
    %s131 = ssub.s32 %s19, %s31
    %p132 = scmp.eq.s32.totalorder %s131, 0
    %s134 = sadd.s32 %s133, 1
    %s135 = scalar_select %p132, %s133, %s134
    %p138 = pneg %p132
    %p139 = scmp.eq.s32.totalorder %s12, 1
    %p140 = por %p138, %p139
    %p141 = scmp.ne.s32.totalorder %s133, %s136
    %p142 = scmp.eq.s32.totalorder %s12, 0
    %p143 = por %p141, %p142
    %p144 = scmp.ne.s32.totalorder %s133, %s136
    %p145 = scmp.eq.s32.totalorder %s17, 1
    %p146 = por %p144, %p145
    %p147 = scmp.ne.s32.totalorder %s136, %s137
    %p148 = scmp.eq.s32.totalorder %s17, 0
    %p149 = por %p147, %p148
    %p150 = scmp.ne.s32.totalorder %s136, %s137
    %p151 = scmp.eq.s32.totalorder %s18, 1
    %p152 = por %p150, %p151
    %p154 = scmp.ne.s32.totalorder %s137, %s153
    %p155 = scmp.eq.s32.totalorder %s18, 0
    %p156 = por %p154, %p155
    %s158 = sadd.s32 %s157, 1
    %p161 = scmp.eq.s32.totalorder %s12, 1
    %p162 = scmp.ne.s32.totalorder %s157, %s159
    %p163 = scmp.eq.s32.totalorder %s12, 0
    %p164 = por %p162, %p163
    %p165 = scmp.ne.s32.totalorder %s157, %s159
    %p166 = scmp.eq.s32.totalorder %s17, 1
    %p167 = por %p165, %p166
    %p168 = scmp.ne.s32.totalorder %s159, %s160
    %p169 = scmp.eq.s32.totalorder %s17, 0
    %p170 = por %p168, %p169
    %p171 = scmp.ne.s32.totalorder %s159, %s160
    %p172 = scmp.eq.s32.totalorder %s18, 1
    %p173 = por %p171, %p172
    %p175 = scmp.ne.s32.totalorder %s160, %s174
    %p176 = scmp.eq.s32.totalorder %s18, 0
    %p177 = por %p175, %p176
    %s178 = ssub.s32 %s19, %s31
    %p179 = scmp.eq.s32.totalorder %s178, 0
    %s181 = sadd.s32 %s180, 1
    %s182 = scalar_select %p179, %s180, %s181
    %p185 = pneg %p179
    %p186 = scmp.eq.s32.totalorder %s12, 1
    %p187 = por %p185, %p186
    %p188 = scmp.ne.s32.totalorder %s180, %s183
    %p189 = scmp.eq.s32.totalorder %s12, 0
    %p190 = por %p188, %p189
    %p191 = scmp.ne.s32.totalorder %s180, %s183
    %p192 = scmp.eq.s32.totalorder %s17, 1
    %p193 = por %p191, %p192
    %p194 = scmp.ne.s32.totalorder %s183, %s184
    %p195 = scmp.eq.s32.totalorder %s17, 0
    %p196 = por %p194, %p195
    %p197 = scmp.ne.s32.totalorder %s183, %s184
    %p198 = scmp.eq.s32.totalorder %s18, 1
    %p199 = por %p197, %p198
    %p201 = scmp.ne.s32.totalorder %s184, %s200
    %p202 = scmp.eq.s32.totalorder %s18, 0
    %p203 = por %p201, %p202
    %p204 = scmp.le.s32.totalorder 1, %s12
    %p205 = scmp.lt.s32.totalorder %s12, 3
    %p206 = pnand %p204, %p205
    %p207 = pneg %p206
    // Predicated region
    $region9: #{tpu_custom_call.1} parent=5 // pred_check
      _
    $region10: #{tpu_custom_call.1} parent=5 // pred_check_branch
      %209 = sbr.rel (%p206) target = $region12
    $region11: #{tpu_custom_call.1} parent=5 // pred_region
      %s210 = ssub.s32 %s12, 1
      // Predicated region
      $region13: #{tpu_custom_call.1} parent=11 // pred_check
        %p211 = pneg %p76
      $region14: #{tpu_custom_call.1} parent=11 // pred_check_branch
        %213 = sbr.rel (%p211) target = $region16
      $region15: #{tpu_custom_call.1} parent=11 // pred_region
        %p214 = scmp.lt.s32.totalorder %s22, 0
        %s215 = scalar_select %p214, %s22, 0
        %s216 = smul.addr %s215, 8
        %s217 = scalar_lea.vmem %s1, %s216
      $region16: #{tpu_custom_call.1} parent=11 // pred_fallthru
        _
      // Predicated region
      $region17: #{tpu_custom_call.1} parent=11 // pred_check
        %p218 = pneg %p123
      $region18: #{tpu_custom_call.1} parent=11 // pred_check_branch
        %220 = sbr.rel (%p218) target = $region20
      $region19: #{tpu_custom_call.1} parent=11 // pred_region
        _
      $region20: #{tpu_custom_call.1} parent=11 // pred_fallthru
        _
      // Predicated region
      $region21: #{tpu_custom_call.1} parent=11 // pred_check
        %p221 = pneg %p170
      $region22: #{tpu_custom_call.1} parent=11 // pred_check_branch
        %223 = sbr.rel (%p221) target = $region24
      $region23: #{tpu_custom_call.1} parent=11 // pred_region
        _
      $region24: #{tpu_custom_call.1} parent=11 // pred_fallthru
        _
    $region12: #{tpu_custom_call.1} parent=5 // pred_fallthru
      _
    %p224 = scmp.lt.s32.totalorder %s12, 2
    // Predicated region
    $region25: #{tpu_custom_call.1} parent=5 // pred_check
      %p225 = pneg %p224
    $region26: #{tpu_custom_call.1} parent=5 // pred_check_branch
      %227 = sbr.rel (%p225) target = $region28
    $region27: #{tpu_custom_call.1} parent=5 // pred_region
      // Predicated region
      $region29: #{tpu_custom_call.1} parent=27 // pred_check
        %p228 = pneg %p44
      $region30: #{tpu_custom_call.1} parent=27 // pred_check_branch
        %230 = sbr.rel (%p228) target = $region32
      $region31: #{tpu_custom_call.1} parent=27 // pred_region
        %s231 = smul.u32 8, %s19
        %p232 = scmp.lt.s32.totalorder %s231, 15
        %s233 = scalar_select %p232, %s231, 15
        %s234 = smul.addr %s233, 8
        %s235 = scalar_lea.vmem %s0, %s234
        %s236 = smul.u32 8, %s19
      $region32: #{tpu_custom_call.1} parent=27 // pred_fallthru
        _
      // Predicated region
      $region33: #{tpu_custom_call.1} parent=27 // pred_check
        %p237 = pneg %p96
      $region34: #{tpu_custom_call.1} parent=27 // pred_check_branch
        %239 = sbr.rel (%p237) target = $region36
      $region35: #{tpu_custom_call.1} parent=27 // pred_region
        %s240 = smul.u32 8, %s19
        %p241 = scmp.lt.s32.totalorder %s240, 15
        %s242 = scalar_select %p241, %s240, 15
        %s243 = smul.addr %s242, 8
        %s244 = scalar_lea.vmem %s2, %s243
        %s245 = smul.u32 8, %s19
      $region36: #{tpu_custom_call.1} parent=27 // pred_fallthru
        _
      // Predicated region
      $region37: #{tpu_custom_call.1} parent=27 // pred_check
        %p246 = pneg %p143
      $region38: #{tpu_custom_call.1} parent=27 // pred_check_branch
        %248 = sbr.rel (%p246) target = $region40
      $region39: #{tpu_custom_call.1} parent=27 // pred_region
        %s249 = smul.u32 8, %s19
        %p250 = scmp.lt.s32.totalorder %s249, 15
        %s251 = scalar_select %p250, %s249, 15
        %s252 = smul.addr %s251, 8
        %s253 = scalar_lea.vmem %s4, %s252
        %s254 = smul.u32 8, %s19
      $region40: #{tpu_custom_call.1} parent=27 // pred_fallthru
        _
    $region28: #{tpu_custom_call.1} parent=5 // pred_fallthru
      _
    %p255 = scmp.le.s32.totalorder 1, %s12
    %p256 = scmp.lt.s32.totalorder %s12, 3
    %p257 = pnand %p255, %p256
    %p258 = pneg %p257
    // Predicated region
    $region41: #{tpu_custom_call.1} parent=5 // pred_check
      _
    $region42: #{tpu_custom_call.1} parent=5 // pred_check_branch
      %260 = sbr.rel (%p257) target = $region44
    $region43: #{tpu_custom_call.1} parent=5 // pred_region
      %s261 = ssub.s32 %s12, 1
      %s262 = smul.u32 8, %s21
      %p263 = scmp.lt.s32.totalorder %s262, 15
      %s264 = scalar_select %p263, %s262, 15
      %s265 = smul.addr %s264, 8
      %s266 = scalar_lea.vmem %s0, %s265
      %p267 = pneg %p50
      %p268 = pneg %p47
      %p269 = scmp.lt.s32.totalorder %s22, 0
      %s270 = scalar_select %p269, %s22, 0
      %s271 = smul.addr %s270, 8
      %s272 = scalar_lea.vmem %s1, %s271
      %p273 = pneg %p76
      %p274 = pneg %p73
      %s275 = smul.u32 8, %s21
      %p276 = scmp.lt.s32.totalorder %s275, 15
      %s277 = scalar_select %p276, %s275, 15
      %s278 = smul.addr %s277, 8
      %s279 = scalar_lea.vmem %s2, %s278
      %p280 = pneg %p102
      %p281 = pneg %p99
      %p282 = pneg %p123
      %p283 = pneg %p120
      %s284 = smul.u32 8, %s21
      %p285 = scmp.lt.s32.totalorder %s284, 15
      %s286 = scalar_select %p285, %s284, 15
      %s287 = smul.addr %s286, 8
      %s288 = scalar_lea.vmem %s4, %s287
      %p289 = pneg %p149
      %p290 = pneg %p146
      %p291 = pneg %p170
      %p292 = pneg %p167
      %p293 = pneg %p196
      %p294 = pneg %p193
      %s295 = smul.u32 8, %s21
      %p296 = scmp.lt.s32.totalorder %s295, 15
      %s297 = scalar_select %p296, %s295, 15
      %s298 = smul.addr %s297, 8
      %s299 = scalar_lea.vmem %s6, %s298
      %s300 = smul.u32 8, %s21
      %p301 = scmp.lt.s32.totalorder %s300, 15
      %s302 = scalar_select %p301, %s300, 15
      %s303 = smul.addr %s302, 8
      %s304 = scalar_lea.vmem %s0, %s303
      %s305 = smul.u32 8, %s21
      %p306 = scmp.lt.s32.totalorder %s22, 0
      %s307 = scalar_select %p306, %s22, 0
      %s308 = smul.addr %s307, 8
      %s309 = scalar_lea.vmem %s1, %s308
      %s310 = smul.u32 8, %s21
      %p311 = scmp.lt.s32.totalorder %s310, 15
      %s312 = scalar_select %p311, %s310, 15
      %s313 = smul.addr %s312, 8
      %s314 = scalar_lea.vmem %s2, %s313
      %s315 = smul.u32 8, %s21
      %s316 = smul.u32 8, %s21
      %p317 = scmp.lt.s32.totalorder %s316, 15
      %s318 = scalar_select %p317, %s316, 15
      %s319 = smul.addr %s318, 8
      %s320 = scalar_lea.vmem %s4, %s319
      %s321 = smul.u32 8, %s21
      %s322 = smul.u32 8, %s21
      %p323 = scmp.lt.s32.totalorder %s322, 15
      %s324 = scalar_select %p323, %s322, 15
      %s325 = smul.addr %s324, 8
      %s326 = scalar_lea.vmem %s6, %s325
      %s327 = smul.u32 8, %s21
      %p328 = scmp.eq.s32.totalorder %s22, 0
      // Predicated region
      $region45: #{tpu_custom_call.1} parent=43 // pred_check
        %p329 = pneg %p328
      $region46: #{tpu_custom_call.1} parent=43 // pred_check_branch
        %331 = sbr.rel (%p329) target = $region48
      $region47: #{tpu_custom_call.1} parent=43 // pred_region
        %vm332 = vcmask 7168
        %333 = vst.msk [vmem:[#allocation2] sm:$0xff] %vm332, -inf
        %334 = vst.msk [vmem:[#allocation2 + $0x8] sm:$0xff] %vm332, -inf
        %335 = vst.msk [vmem:[#allocation2 + $0x10] sm:$0xff] %vm332, -inf
        %336 = vst.msk [vmem:[#allocation2 + $0x18] sm:$0xff] %vm332, -inf
        %337 = vst.msk [vmem:[#allocation2 + $0x20] sm:$0xff] %vm332, -inf
        %338 = vst.msk [vmem:[#allocation2 + $0x28] sm:$0xff] %vm332, -inf
        %339 = vst.msk [vmem:[#allocation2 + $0x30] sm:$0xff] %vm332, -inf
        %340 = vst.msk [vmem:[#allocation2 + $0x38] sm:$0xff] %vm332, -inf
        %341 = vst.msk [vmem:[#allocation3] sm:$0xff] %vm332, inf
        %342 = vst.msk [vmem:[#allocation3 + $0x8] sm:$0xff] %vm332, inf
        %343 = vst.msk [vmem:[#allocation3 + $0x10] sm:$0xff] %vm332, inf
        %344 = vst.msk [vmem:[#allocation3 + $0x18] sm:$0xff] %vm332, inf
        %345 = vst.msk [vmem:[#allocation3 + $0x20] sm:$0xff] %vm332, inf
        %346 = vst.msk [vmem:[#allocation3 + $0x28] sm:$0xff] %vm332, inf
        %347 = vst.msk [vmem:[#allocation3 + $0x30] sm:$0xff] %vm332, inf
        %348 = vst.msk [vmem:[#allocation3 + $0x38] sm:$0xff] %vm332, inf
      $region48: #{tpu_custom_call.1} parent=43 // pred_fallthru
        _
      %v349 = vld [vmem:[%s304] sm:$0xff]
      %v350 = vld [vmem:[%s304 + $0x8] sm:$0xff]
      %v351 = vld [vmem:[%s304 + $0x10] sm:$0xff]
      %v352 = vld [vmem:[%s304 + $0x18] sm:$0xff]
      %v353 = vld [vmem:[%s304 + $0x20] sm:$0xff]
      %v354 = vld [vmem:[%s304 + $0x28] sm:$0xff]
      %v355 = vld [vmem:[%s304 + $0x30] sm:$0xff]
      %v356 = vld [vmem:[%s304 + $0x38] sm:$0xff]
      %v357 = vld [vmem:[%s309] sm:$0xff]
      %v358 = vld [vmem:[%s309 + $0x8] sm:$0xff]
      %v359 = vld [vmem:[%s309 + $0x10] sm:$0xff]
      %v360 = vld [vmem:[%s309 + $0x18] sm:$0xff]
      %vm361 = vcmask 261120
      %v363 = vsel %vm361, %v349, 0
      %v366 = vsel %vm361, %v350, 0
      %v369 = vsel %vm361, %v351, 0
      %v372 = vsel %vm361, %v352, 0
      %v375 = vsel %vm361, %v353, 0
      %v378 = vsel %vm361, %v354, 0
      %v381 = vsel %vm361, %v355, 0
      %v384 = vsel %vm361, %v356, 0
      %386 = vmatprep.subr.mxu0 0.0
      %387 = vmatpush1.msra.mxu0 0.0
      %388 = vmatprep.subr.mxu0 0.0
      %389 = vmatpush1.msra.mxu0 0.0
      %390 = vmatprep.subr.mxu0 0.0
      %391 = vmatpush1.msra.mxu0 0.0
      %392 = vmatprep.subr.mxu0 0.0
      %393 = vmatpush1.msra.mxu0 0.0
      %394 = vmatprep.subr.mxu0 0.0
      %395 = vmatpush1.msra.mxu0 0.0
      %396 = vmatprep.subr.mxu0 0.0
      %397 = vmatpush1.msra.mxu0 0.0
      %398 = vmatprep.subr.mxu0 0.0
      %399 = vmatpush1.msra.mxu0 0.0
      %400 = vmatprep.subr.mxu0 0.0
      %401 = vmatpush1.msra.mxu0 0.0
      %402 = vmatprep.subr.mxu0 0.0
      %403 = vmatpush1.msra.mxu0 0.0
      %404 = vmatprep.subr.mxu0 0.0
      %405 = vmatpush1.msra.mxu0 0.0
      %406 = vmatprep.subr.mxu0 0.0
      %407 = vmatpush1.msra.mxu0 0.0
      %408 = vmatprep.subr.mxu0 0.0
      %409 = vmatpush1.msra.mxu0 0.0
      %410 = vmatprep.subr.mxu0 0.0
      %411 = vmatpush1.msra.mxu0 %v360
      %412 = vmatprep.subr.mxu0 0.0
      %413 = vmatpush1.msra.mxu0 %v359
      %414 = vmatprep.subr.mxu0 0.0
      %415 = vmatpush1.msra.mxu0 %v358
      %416 = vmatprep.subr.mxu0 0.0
      %417 = vmatpush1.msra.mxu0 %v357
      %418 = vmatprep.subr.mxu0 0.0
      %419 = vmatpush2.msra.mxu0 0.0
      %420 = vmatprep.subr.mxu0 0.0
      %421 = vmatpush2.msra.mxu0 0.0
      %422 = vmatprep.subr.mxu0 0.0
      %423 = vmatpush2.msra.mxu0 0.0
      %424 = vmatprep.subr.mxu0 0.0
      %425 = vmatpush2.msra.mxu0 0.0
      %426 = vmatprep.subr.mxu0 0.0
      %427 = vmatpush2.msra.mxu0 0.0
      %428 = vmatprep.subr.mxu0 0.0
      %429 = vmatpush2.msra.mxu0 0.0
      %430 = vmatprep.subr.mxu0 0.0
      %431 = vmatpush2.msra.mxu0 0.0
      %432 = vmatprep.subr.mxu0 0.0
      %433 = vmatpush2.msra.mxu0 0.0
      %434 = vmatprep.subr.mxu0 0.0
      %435 = vmatpush2.msra.mxu0 0.0
      %436 = vmatprep.subr.mxu0 0.0
      %437 = vmatpush2.msra.mxu0 0.0
      %438 = vmatprep.subr.mxu0 0.0
      %439 = vmatpush2.msra.mxu0 0.0
      %440 = vmatprep.subr.mxu0 0.0
      %441 = vmatpush2.msra.mxu0 0.0
      %442 = vmatprep.subr.mxu0 0.0
      %443 = vmatpush2.msra.mxu0 0.0
      %444 = vmatprep.subr.mxu0 0.0
      %445 = vmatpush2.msra.mxu0 0.0
      %446 = vmatprep.subr.mxu0 0.0
      %447 = vmatpush2.msra.mxu0 0.0
      %448 = vmatprep.subr.mxu0 0.0
      %449 = vmatpush2.msra.mxu0 0.0
      %450 = vmatprep.mubr.f32.mxu0 0.0
      %451 = vmatmul.mubr.f32.gmra.mxu0 %v363
      %v452 = vpop.f32.mrf.mxu0
      %v453 = vadd.f32 0.0, %v452
      %v454 = vpop.f32.mrf.mxu0
      %455 = vmatprep.mubr.f32.mxu0 0.0
      %456 = vmatmul.mubr.f32.gmra.mxu0 %v366
      %v457 = vpop.f32.mrf.mxu0
      %v458 = vadd.f32 0.0, %v457
      %v459 = vpop.f32.mrf.mxu0
      %460 = vmatprep.mubr.f32.mxu0 0.0
      %461 = vmatmul.mubr.f32.gmra.mxu0 %v369
      %v462 = vpop.f32.mrf.mxu0
      %v463 = vadd.f32 0.0, %v462
      %v464 = vpop.f32.mrf.mxu0
      %465 = vmatprep.mubr.f32.mxu0 0.0
      %466 = vmatmul.mubr.f32.gmra.mxu0 %v372
      %v467 = vpop.f32.mrf.mxu0
      %v468 = vadd.f32 0.0, %v467
      %v469 = vpop.f32.mrf.mxu0
      %470 = vmatprep.mubr.f32.mxu0 0.0
      %471 = vmatmul.mubr.f32.gmra.mxu0 %v375
      %v472 = vpop.f32.mrf.mxu0
      %v473 = vadd.f32 0.0, %v472
      %v474 = vpop.f32.mrf.mxu0
      %475 = vmatprep.mubr.f32.mxu0 0.0
      %476 = vmatmul.mubr.f32.gmra.mxu0 %v378
      %v477 = vpop.f32.mrf.mxu0
      %v478 = vadd.f32 0.0, %v477
      %v479 = vpop.f32.mrf.mxu0
      %480 = vmatprep.mubr.f32.mxu0 0.0
      %481 = vmatmul.mubr.f32.gmra.mxu0 %v381
      %v482 = vpop.f32.mrf.mxu0
      %v483 = vadd.f32 0.0, %v482
      %v484 = vpop.f32.mrf.mxu0
      %485 = vmatprep.mubr.f32.mxu0 0.0
      %486 = vmatmul.mubr.f32.gmra.mxu0 %v384
      %v487 = vpop.f32.mrf.mxu0
      %v488 = vadd.f32 0.0, %v487
      %v489 = vpop.f32.mrf.mxu0
      %490 = vdwg.mxu0
      %s491 = smul.u32 %s22, 128
      %s492 = sshra.s32 %s491, 7
      %s493 = sand.u32 %s491, 127
      %s494 = scalar_lea.vmem %s3, %s492
      %v495 = vld [vmem:[%s494] sm:$0x1]
      %s496 = scalar_lea.vmem %s5, %s492
      %v497 = vld [vmem:[%s496] sm:$0x1]
      %v498 = vld [vmem:[%s314] sm:$0xff]
      %v499 = vld [vmem:[%s314 + $0x8] sm:$0xff]
      %v500 = vld [vmem:[%s314 + $0x10] sm:$0xff]
      %v501 = vld [vmem:[%s314 + $0x18] sm:$0xff]
      %v502 = vld [vmem:[%s314 + $0x20] sm:$0xff]
      %v503 = vld [vmem:[%s314 + $0x28] sm:$0xff]
      %v504 = vld [vmem:[%s314 + $0x30] sm:$0xff]
      %v505 = vld [vmem:[%s314 + $0x38] sm:$0xff]
      %507 = vset.pattern.permute.xlu0 0
      %508 = vperm.xlu0 %507, %v498
      %v509 = vpop.permute.xlu0 %508
      %512 = vset.pattern.permute.xlu0 0
      %513 = vperm.xlu0 %512, %v499
      %v514 = vpop.permute.xlu0 %513
      %517 = vset.pattern.permute.xlu0 0
      %518 = vperm.xlu0 %517, %v500
      %v519 = vpop.permute.xlu0 %518
      %522 = vset.pattern.permute.xlu0 0
      %523 = vperm.xlu0 %522, %v501
      %v524 = vpop.permute.xlu0 %523
      %527 = vset.pattern.permute.xlu0 0
      %528 = vperm.xlu0 %527, %v502
      %v529 = vpop.permute.xlu0 %528
      %532 = vset.pattern.permute.xlu0 0
      %533 = vperm.xlu0 %532, %v503
      %v534 = vpop.permute.xlu0 %533
      %537 = vset.pattern.permute.xlu0 0
      %538 = vperm.xlu0 %537, %v504
      %v539 = vpop.permute.xlu0 %538
      %542 = vset.pattern.permute.xlu0 0
      %543 = vperm.xlu0 %542, %v505
      %v544 = vpop.permute.xlu0 %543
      %v547 = vlaneseq
      %v548 = vshrl.u32 %v547, 7
      %v549 = vsub.s32 0, %v548
      %v550 = vrot.slane %v495, %v549
      %v552 = vadd.f32 %v509, %v550
      %v553 = vadd.f32 %v514, %v550
      %v554 = vadd.f32 %v519, %v550
      %v555 = vadd.f32 %v524, %v550
      %v556 = vadd.f32 %v529, %v550
      %v557 = vadd.f32 %v534, %v550
      %v558 = vadd.f32 %v539, %v550
      %v559 = vadd.f32 %v544, %v550
      %v560 = vsub.f32 %v552, %v453
      %v561 = vsub.f32 %v553, %v458
      %v562 = vsub.f32 %v554, %v463
      %v563 = vsub.f32 %v555, %v468
      %v564 = vsub.f32 %v556, %v473
      %v565 = vsub.f32 %v557, %v478
      %v566 = vsub.f32 %v558, %v483
      %v567 = vsub.f32 %v559, %v488
      %v568 = vlaneseq
      %v569 = vshrl.u32 %v568, 7
      %v570 = vadd.s32 %v569, 8
      %v571 = vadd.s32 %v569, 16
      %v572 = vadd.s32 %v569, 24
      %v573 = vadd.s32 %v569, 32
      %v574 = vadd.s32 %v569, 40
      %v575 = vadd.s32 %v569, 48
      %v576 = vadd.s32 %v569, 56
      %s577 = smul.u32 %s21, 64
      %s578 = ssub.s32 %s577, %s491
      %v579 = vstv %s578
      %v580 = vadd.s32 %v569, %v579
      %v581 = vadd.s32 %v570, %v579
      %v582 = vadd.s32 %v571, %v579
      %v583 = vadd.s32 %v572, %v579
      %v584 = vadd.s32 %v573, %v579
      %v585 = vadd.s32 %v574, %v579
      %v586 = vadd.s32 %v575, %v579
      %v587 = vadd.s32 %v576, %v579
      %v588 = vlaneseq
      %v589 = vand.u32 %v588, 127
      %vm590 = vcmp.eq.s32.totalorder %v580, %v589
      %vm591 = vcmp.eq.s32.totalorder %v581, %v589
      %vm592 = vcmp.eq.s32.totalorder %v582, %v589
      %vm593 = vcmp.eq.s32.totalorder %v583, %v589
      %vm594 = vcmp.eq.s32.totalorder %v584, %v589
      %vm595 = vcmp.eq.s32.totalorder %v585, %v589
      %vm596 = vcmp.eq.s32.totalorder %v586, %v589
      %vm597 = vcmp.eq.s32.totalorder %v587, %v589
      %v598 = vld [vmem:[%s320] sm:$0xff]
      %v599 = vld [vmem:[%s320 + $0x8] sm:$0xff]
      %v600 = vld [vmem:[%s320 + $0x10] sm:$0xff]
      %v601 = vld [vmem:[%s320 + $0x18] sm:$0xff]
      %v602 = vld [vmem:[%s320 + $0x20] sm:$0xff]
      %v603 = vld [vmem:[%s320 + $0x28] sm:$0xff]
      %v604 = vld [vmem:[%s320 + $0x30] sm:$0xff]
      %v605 = vld [vmem:[%s320 + $0x38] sm:$0xff]
      %606 = vset.pattern.permute.xlu0 0
      %607 = vperm.xlu0 %606, %v598
      %v608 = vpop.permute.xlu0 %607
      %609 = vset.pattern.permute.xlu0 0
      %610 = vperm.xlu0 %609, %v599
      %v611 = vpop.permute.xlu0 %610
      %612 = vset.pattern.permute.xlu0 0
      %613 = vperm.xlu0 %612, %v600
      %v614 = vpop.permute.xlu0 %613
      %615 = vset.pattern.permute.xlu0 0
      %616 = vperm.xlu0 %615, %v601
      %v617 = vpop.permute.xlu0 %616
      %618 = vset.pattern.permute.xlu0 0
      %619 = vperm.xlu0 %618, %v602
      %v620 = vpop.permute.xlu0 %619
      %621 = vset.pattern.permute.xlu0 0
      %622 = vperm.xlu0 %621, %v603
      %v623 = vpop.permute.xlu0 %622
      %624 = vset.pattern.permute.xlu0 0
      %625 = vperm.xlu0 %624, %v604
      %v626 = vpop.permute.xlu0 %625
      %627 = vset.pattern.permute.xlu0 0
      %628 = vperm.xlu0 %627, %v605
      %v629 = vpop.permute.xlu0 %628
      %v630 = vlaneseq
      %v631 = vshrl.u32 %v630, 7
      %v632 = vsub.s32 0, %v631
      %v633 = vrot.slane %v497, %v632
      %vm634 = vcmp.eq.s32.totalorder %v608, %v633
      %vm635 = vcmp.eq.s32.totalorder %v611, %v633
      %vm636 = vcmp.eq.s32.totalorder %v614, %v633
      %vm637 = vcmp.eq.s32.totalorder %v617, %v633
      %vm638 = vcmp.eq.s32.totalorder %v620, %v633
      %vm639 = vcmp.eq.s32.totalorder %v623, %v633
      %vm640 = vcmp.eq.s32.totalorder %v626, %v633
      %vm641 = vcmp.eq.s32.totalorder %v629, %v633
      %vm642 = vmxor %vm590, 1
      %vm643 = vmxor %vm591, 1
      %vm644 = vmxor %vm592, 1
      %vm645 = vmxor %vm593, 1
      %vm646 = vmxor %vm594, 1
      %vm647 = vmxor %vm595, 1
      %vm648 = vmxor %vm596, 1
      %vm649 = vmxor %vm597, 1
      %vm650 = vmand %vm634, %vm642
      %vm651 = vmand %vm635, %vm643
      %vm652 = vmand %vm636, %vm644
      %vm653 = vmand %vm637, %vm645
      %vm654 = vmand %vm638, %vm646
      %vm655 = vmand %vm639, %vm647
      %vm656 = vmand %vm640, %vm648
      %vm657 = vmand %vm641, %vm649
      %vm658 = vmxor %vm634, 1
      %vm659 = vmxor %vm635, 1
      %vm660 = vmxor %vm636, 1
      %vm661 = vmxor %vm637, 1
      %vm662 = vmxor %vm638, 1
      %vm663 = vmxor %vm639, 1
      %vm664 = vmxor %vm640, 1
      %vm665 = vmxor %vm641, 1
      %v666 = vld [vmem:[#allocation2] sm:$0xff]
      %v667 = vld [vmem:[#allocation2 + $0x8] sm:$0xff]
      %v668 = vld [vmem:[#allocation2 + $0x10] sm:$0xff]
      %v669 = vld [vmem:[#allocation2 + $0x18] sm:$0xff]
      %v670 = vld [vmem:[#allocation2 + $0x20] sm:$0xff]
      %v671 = vld [vmem:[#allocation2 + $0x28] sm:$0xff]
      %v672 = vld [vmem:[#allocation2 + $0x30] sm:$0xff]
      %v673 = vld [vmem:[#allocation2 + $0x38] sm:$0xff]
      %v674 = vsel %vm650, %v560, -inf
      %v675 = vsel %vm651, %v561, -inf
      %v676 = vsel %vm652, %v562, -inf
      %v677 = vsel %vm653, %v563, -inf
      %v678 = vsel %vm654, %v564, -inf
      %v679 = vsel %vm655, %v565, -inf
      %v680 = vsel %vm656, %v566, -inf
      %v681 = vsel %vm657, %v567, -inf
      %682 = vmax.xlane.f32.xlu0 %v674
      %v683 = vpop.xlane.xlu0 %682
      %684 = vmax.xlane.f32.xlu0 %v675
      %v685 = vpop.xlane.xlu0 %684
      %686 = vmax.xlane.f32.xlu0 %v676
      %v687 = vpop.xlane.xlu0 %686
      %688 = vmax.xlane.f32.xlu0 %v677
      %v689 = vpop.xlane.xlu0 %688
      %690 = vmax.xlane.f32.xlu0 %v678
      %v691 = vpop.xlane.xlu0 %690
      %692 = vmax.xlane.f32.xlu0 %v679
      %v693 = vpop.xlane.xlu0 %692
      %694 = vmax.xlane.f32.xlu0 %v680
      %v695 = vpop.xlane.xlu0 %694
      %696 = vmax.xlane.f32.xlu0 %v681
      %v697 = vpop.xlane.xlu0 %696
      %v698 = vmax.f32 %v666, %v683
      %v699 = vmax.f32 %v667, %v685
      %v700 = vmax.f32 %v668, %v687
      %v701 = vmax.f32 %v669, %v689
      %v702 = vmax.f32 %v670, %v691
      %v703 = vmax.f32 %v671, %v693
      %v704 = vmax.f32 %v672, %v695
      %v705 = vmax.f32 %v673, %v697
      %vm706 = vcmask 7168
      %707 = vst.msk [vmem:[#allocation2] sm:$0xff] %vm706, %v698
      %708 = vst.msk [vmem:[#allocation2 + $0x8] sm:$0xff] %vm706, %v699
      %709 = vst.msk [vmem:[#allocation2 + $0x10] sm:$0xff] %vm706, %v700
      %710 = vst.msk [vmem:[#allocation2 + $0x18] sm:$0xff] %vm706, %v701
      %711 = vst.msk [vmem:[#allocation2 + $0x20] sm:$0xff] %vm706, %v702
      %712 = vst.msk [vmem:[#allocation2 + $0x28] sm:$0xff] %vm706, %v703
      %713 = vst.msk [vmem:[#allocation2 + $0x30] sm:$0xff] %vm706, %v704
      %714 = vst.msk [vmem:[#allocation2 + $0x38] sm:$0xff] %vm706, %v705
      %v715 = vld [vmem:[#allocation3] sm:$0xff]
      %v716 = vld [vmem:[#allocation3 + $0x8] sm:$0xff]
      %v717 = vld [vmem:[#allocation3 + $0x10] sm:$0xff]
      %v718 = vld [vmem:[#allocation3 + $0x18] sm:$0xff]
      %v719 = vld [vmem:[#allocation3 + $0x20] sm:$0xff]
      %v720 = vld [vmem:[#allocation3 + $0x28] sm:$0xff]
      %v721 = vld [vmem:[#allocation3 + $0x30] sm:$0xff]
      %v722 = vld [vmem:[#allocation3 + $0x38] sm:$0xff]
      %v723 = vsel %vm658, %v560, inf
      %v724 = vsel %vm659, %v561, inf
      %v725 = vsel %vm660, %v562, inf
      %v726 = vsel %vm661, %v563, inf
      %v727 = vsel %vm662, %v564, inf
      %v728 = vsel %vm663, %v565, inf
      %v729 = vsel %vm664, %v566, inf
      %v730 = vsel %vm665, %v567, inf
      %731 = vmin.xlane.f32.xlu0 %v723
      %v732 = vpop.xlane.xlu0 %731
      %733 = vmin.xlane.f32.xlu0 %v724
      %v734 = vpop.xlane.xlu0 %733
      %735 = vmin.xlane.f32.xlu0 %v725
      %v736 = vpop.xlane.xlu0 %735
      %737 = vmin.xlane.f32.xlu0 %v726
      %v738 = vpop.xlane.xlu0 %737
      %739 = vmin.xlane.f32.xlu0 %v727
      %v740 = vpop.xlane.xlu0 %739
      %741 = vmin.xlane.f32.xlu0 %v728
      %v742 = vpop.xlane.xlu0 %741
      %743 = vmin.xlane.f32.xlu0 %v729
      %v744 = vpop.xlane.xlu0 %743
      %745 = vmin.xlane.f32.xlu0 %v730
      %v746 = vpop.xlane.xlu0 %745
      %v747 = vmin.f32 %v715, %v732
      %v748 = vmin.f32 %v716, %v734
      %v749 = vmin.f32 %v717, %v736
      %v750 = vmin.f32 %v718, %v738
      %v751 = vmin.f32 %v719, %v740
      %v752 = vmin.f32 %v720, %v742
      %v753 = vmin.f32 %v721, %v744
      %v754 = vmin.f32 %v722, %v746
      %755 = vst.msk [vmem:[#allocation3] sm:$0xff] %vm706, %v747
      %756 = vst.msk [vmem:[#allocation3 + $0x8] sm:$0xff] %vm706, %v748
      %757 = vst.msk [vmem:[#allocation3 + $0x10] sm:$0xff] %vm706, %v749
      %758 = vst.msk [vmem:[#allocation3 + $0x18] sm:$0xff] %vm706, %v750
      %759 = vst.msk [vmem:[#allocation3 + $0x20] sm:$0xff] %vm706, %v751
      %760 = vst.msk [vmem:[#allocation3 + $0x28] sm:$0xff] %vm706, %v752
      %761 = vst.msk [vmem:[#allocation3 + $0x30] sm:$0xff] %vm706, %v753
      %762 = vst.msk [vmem:[#allocation3 + $0x38] sm:$0xff] %vm706, %v754
      // Predicated region
      $region49: #{tpu_custom_call.1} parent=43 // pred_check
        %p763 = pneg %p328
      $region50: #{tpu_custom_call.1} parent=43 // pred_check_branch
        %765 = sbr.rel (%p763) target = $region52
      $region51: #{tpu_custom_call.1} parent=43 // pred_region
        %v766 = vld [vmem:[#allocation2] sm:$0xff]
        %v767 = vld [vmem:[#allocation2 + $0x8] sm:$0xff]
        %v768 = vld [vmem:[#allocation2 + $0x10] sm:$0xff]
        %v769 = vld [vmem:[#allocation2 + $0x18] sm:$0xff]
        %v770 = vld [vmem:[#allocation2 + $0x20] sm:$0xff]
        %v771 = vld [vmem:[#allocation2 + $0x28] sm:$0xff]
        %v772 = vld [vmem:[#allocation2 + $0x30] sm:$0xff]
        %v773 = vld [vmem:[#allocation2 + $0x38] sm:$0xff]
        %v774 = vmul.f32 %v766, 2.0
        %v775 = vmul.f32 %v767, 2.0
        %v776 = vmul.f32 %v768, 2.0
        %v777 = vmul.f32 %v769, 2.0
        %v778 = vmul.f32 %v770, 2.0
        %v779 = vmul.f32 %v771, 2.0
        %v780 = vmul.f32 %v772, 2.0
        %v781 = vmul.f32 %v773, 2.0
        %v782 = vld [vmem:[#allocation3] sm:$0xff]
        %v783 = vld [vmem:[#allocation3 + $0x8] sm:$0xff]
        %v784 = vld [vmem:[#allocation3 + $0x10] sm:$0xff]
        %v785 = vld [vmem:[#allocation3 + $0x18] sm:$0xff]
        %v786 = vld [vmem:[#allocation3 + $0x20] sm:$0xff]
        %v787 = vld [vmem:[#allocation3 + $0x28] sm:$0xff]
        %v788 = vld [vmem:[#allocation3 + $0x30] sm:$0xff]
        %v789 = vld [vmem:[#allocation3 + $0x38] sm:$0xff]
        %v790 = vmul.f32 %v782, 2.0
        %v791 = vmul.f32 %v783, 2.0
        %v792 = vmul.f32 %v784, 2.0
        %v793 = vmul.f32 %v785, 2.0
        %v794 = vmul.f32 %v786, 2.0
        %v795 = vmul.f32 %v787, 2.0
        %v796 = vmul.f32 %v788, 2.0
        %v797 = vmul.f32 %v789, 2.0
        %vm798 = vcmp.eq.f32.partialorder %v774, -inf
        %vm799 = vcmp.eq.f32.partialorder %v775, -inf
        %vm800 = vcmp.eq.f32.partialorder %v776, -inf
        %vm801 = vcmp.eq.f32.partialorder %v777, -inf
        %vm802 = vcmp.eq.f32.partialorder %v778, -inf
        %vm803 = vcmp.eq.f32.partialorder %v779, -inf
        %vm804 = vcmp.eq.f32.partialorder %v780, -inf
        %vm805 = vcmp.eq.f32.partialorder %v781, -inf
        %v806 = vmax.f32 %v774, 0.0
        %v807 = vmax.f32 %v775, 0.0
        %v808 = vmax.f32 %v776, 0.0
        %v809 = vmax.f32 %v777, 0.0
        %v810 = vmax.f32 %v778, 0.0
        %v811 = vmax.f32 %v779, 0.0
        %v812 = vmax.f32 %v780, 0.0
        %v813 = vmax.f32 %v781, 0.0
        %v814 = vrsqrt.pop %v806
        %v815 = vmul.f32 %v806, %v814
        %vm816 = vcmp.eq.f32.partialorder %v806, inf
        %v817 = vsel %vm816, %v806, %v815
        %vm818 = vcmp.eq.f32.partialorder %v806, 0.0
        %v819 = vand.u32 %v806, 2147483648
        %v820 = vsel %vm818, %v819, %v817
        %v821 = vrsqrt.pop %v807
        %v822 = vmul.f32 %v807, %v821
        %vm823 = vcmp.eq.f32.partialorder %v807, inf
        %v824 = vsel %vm823, %v807, %v822
        %vm825 = vcmp.eq.f32.partialorder %v807, 0.0
        %v826 = vand.u32 %v807, 2147483648
        %v827 = vsel %vm825, %v826, %v824
        %v828 = vrsqrt.pop %v808
        %v829 = vmul.f32 %v808, %v828
        %vm830 = vcmp.eq.f32.partialorder %v808, inf
        %v831 = vsel %vm830, %v808, %v829
        %vm832 = vcmp.eq.f32.partialorder %v808, 0.0
        %v833 = vand.u32 %v808, 2147483648
        %v834 = vsel %vm832, %v833, %v831
        %v835 = vrsqrt.pop %v809
        %v836 = vmul.f32 %v809, %v835
        %vm837 = vcmp.eq.f32.partialorder %v809, inf
        %v838 = vsel %vm837, %v809, %v836
        %vm839 = vcmp.eq.f32.partialorder %v809, 0.0
        %v840 = vand.u32 %v809, 2147483648
        %v841 = vsel %vm839, %v840, %v838
        %v842 = vrsqrt.pop %v810
        %v843 = vmul.f32 %v810, %v842
        %vm844 = vcmp.eq.f32.partialorder %v810, inf
        %v845 = vsel %vm844, %v810, %v843
        %vm846 = vcmp.eq.f32.partialorder %v810, 0.0
        %v847 = vand.u32 %v810, 2147483648
        %v848 = vsel %vm846, %v847, %v845
        %v849 = vrsqrt.pop %v811
        %v850 = vmul.f32 %v811, %v849
        %vm851 = vcmp.eq.f32.partialorder %v811, inf
        %v852 = vsel %vm851, %v811, %v850
        %vm853 = vcmp.eq.f32.partialorder %v811, 0.0
        %v854 = vand.u32 %v811, 2147483648
        %v855 = vsel %vm853, %v854, %v852
        %v856 = vrsqrt.pop %v812
        %v857 = vmul.f32 %v812, %v856
        %vm858 = vcmp.eq.f32.partialorder %v812, inf
        %v859 = vsel %vm858, %v812, %v857
        %vm860 = vcmp.eq.f32.partialorder %v812, 0.0
        %v861 = vand.u32 %v812, 2147483648
        %v862 = vsel %vm860, %v861, %v859
        %v863 = vrsqrt.pop %v813
        %v864 = vmul.f32 %v813, %v863
        %vm865 = vcmp.eq.f32.partialorder %v813, inf
        %v866 = vsel %vm865, %v813, %v864
        %vm867 = vcmp.eq.f32.partialorder %v813, 0.0
        %v868 = vand.u32 %v813, 2147483648
        %v869 = vsel %vm867, %v868, %v866
        %v870 = vsel %vm798, -inf, %v820
        %v871 = vsel %vm799, -inf, %v827
        %v872 = vsel %vm800, -inf, %v834
        %v873 = vsel %vm801, -inf, %v841
        %v874 = vsel %vm802, -inf, %v848
        %v875 = vsel %vm803, -inf, %v855
        %v876 = vsel %vm804, -inf, %v862
        %v877 = vsel %vm805, -inf, %v869
        %v878 = vmax.f32 %v790, 0.0
        %v879 = vmax.f32 %v791, 0.0
        %v880 = vmax.f32 %v792, 0.0
        %v881 = vmax.f32 %v793, 0.0
        %v882 = vmax.f32 %v794, 0.0
        %v883 = vmax.f32 %v795, 0.0
        %v884 = vmax.f32 %v796, 0.0
        %v885 = vmax.f32 %v797, 0.0
        %v886 = vrsqrt.pop %v878
        %v887 = vmul.f32 %v878, %v886
        %vm888 = vcmp.eq.f32.partialorder %v878, inf
        %v889 = vsel %vm888, %v878, %v887
        %vm890 = vcmp.eq.f32.partialorder %v878, 0.0
        %v891 = vand.u32 %v878, 2147483648
        %v892 = vsel %vm890, %v891, %v889
        %v893 = vrsqrt.pop %v879
        %v894 = vmul.f32 %v879, %v893
        %vm895 = vcmp.eq.f32.partialorder %v879, inf
        %v896 = vsel %vm895, %v879, %v894
        %vm897 = vcmp.eq.f32.partialorder %v879, 0.0
        %v898 = vand.u32 %v879, 2147483648
        %v899 = vsel %vm897, %v898, %v896
        %v900 = vrsqrt.pop %v880
        %v901 = vmul.f32 %v880, %v900
        %vm902 = vcmp.eq.f32.partialorder %v880, inf
        %v903 = vsel %vm902, %v880, %v901
        %vm904 = vcmp.eq.f32.partialorder %v880, 0.0
        %v905 = vand.u32 %v880, 2147483648
        %v906 = vsel %vm904, %v905, %v903
        %v907 = vrsqrt.pop %v881
        %v908 = vmul.f32 %v881, %v907
        %vm909 = vcmp.eq.f32.partialorder %v881, inf
        %v910 = vsel %vm909, %v881, %v908
        %vm911 = vcmp.eq.f32.partialorder %v881, 0.0
        %v912 = vand.u32 %v881, 2147483648
        %v913 = vsel %vm911, %v912, %v910
        %v914 = vrsqrt.pop %v882
        %v915 = vmul.f32 %v882, %v914
        %vm916 = vcmp.eq.f32.partialorder %v882, inf
        %v917 = vsel %vm916, %v882, %v915
        %vm918 = vcmp.eq.f32.partialorder %v882, 0.0
        %v919 = vand.u32 %v882, 2147483648
        %v920 = vsel %vm918, %v919, %v917
        %v921 = vrsqrt.pop %v883
        %v922 = vmul.f32 %v883, %v921
        %vm923 = vcmp.eq.f32.partialorder %v883, inf
        %v924 = vsel %vm923, %v883, %v922
        %vm925 = vcmp.eq.f32.partialorder %v883, 0.0
        %v926 = vand.u32 %v883, 2147483648
        %v927 = vsel %vm925, %v926, %v924
        %v928 = vrsqrt.pop %v884
        %v929 = vmul.f32 %v884, %v928
        %vm930 = vcmp.eq.f32.partialorder %v884, inf
        %v931 = vsel %vm930, %v884, %v929
        %vm932 = vcmp.eq.f32.partialorder %v884, 0.0
        %v933 = vand.u32 %v884, 2147483648
        %v934 = vsel %vm932, %v933, %v931
        %v935 = vrsqrt.pop %v885
        %v936 = vmul.f32 %v885, %v935
        %vm937 = vcmp.eq.f32.partialorder %v885, inf
        %v938 = vsel %vm937, %v885, %v936
        %vm939 = vcmp.eq.f32.partialorder %v885, 0.0
        %v940 = vand.u32 %v885, 2147483648
        %v941 = vsel %vm939, %v940, %v938
        %v942 = vsub.f32 %v870, %v892
        %v943 = vsub.f32 %v871, %v899
        %v944 = vsub.f32 %v872, %v906
        %v945 = vsub.f32 %v873, %v913
        %v946 = vsub.f32 %v874, %v920
        %v947 = vsub.f32 %v875, %v927
        %v948 = vsub.f32 %v876, %v934
        %v949 = vsub.f32 %v877, %v941
        %v950 = vmax.f32 %v942, 0.0
        %v951 = vmax.f32 %v943, 0.0
        %v952 = vmax.f32 %v944, 0.0
        %v953 = vmax.f32 %v945, 0.0
        %v954 = vmax.f32 %v946, 0.0
        %v955 = vmax.f32 %v947, 0.0
        %v956 = vmax.f32 %v948, 0.0
        %v957 = vmax.f32 %v949, 0.0
        %v958 = vand.u32 2147483647, %v942
        %v959 = vand.u32 2147483647, %v943
        %v960 = vand.u32 2147483647, %v944
        %v961 = vand.u32 2147483647, %v945
        %v962 = vand.u32 2147483647, %v946
        %v963 = vand.u32 2147483647, %v947
        %v964 = vand.u32 2147483647, %v948
        %v965 = vand.u32 2147483647, %v949
        %v966 = vsub.f32 0.0, %v958
        %v967 = vsub.f32 0.0, %v959
        %v968 = vsub.f32 0.0, %v960
        %v969 = vsub.f32 0.0, %v961
        %v970 = vsub.f32 0.0, %v962
        %v971 = vsub.f32 0.0, %v963
        %v972 = vsub.f32 0.0, %v964
        %v973 = vsub.f32 0.0, %v965
        %v974 = vmul.f32 %v966, 1.442695
        %v975 = vpow.pop %v974
        %v976 = vmul.f32 %v967, 1.442695
        %v977 = vpow.pop %v976
        %v978 = vmul.f32 %v968, 1.442695
        %v979 = vpow.pop %v978
        %v980 = vmul.f32 %v969, 1.442695
        %v981 = vpow.pop %v980
        %v982 = vmul.f32 %v970, 1.442695
        %v983 = vpow.pop %v982
        %v984 = vmul.f32 %v971, 1.442695
        %v985 = vpow.pop %v984
        %v986 = vmul.f32 %v972, 1.442695
        %v987 = vpow.pop %v986
        %v988 = vmul.f32 %v973, 1.442695
        %v989 = vpow.pop %v988
        %v990 = vadd.f32 %v975, 1.0
        %v991 = vlog2.pop %v990
        %v992 = vmul.f32 %v991, 0.6931472
        %v993 = vmul.f32 -0.5, %v975
        %v994 = vadd.f32 %v993, 1.0
        %v995 = vmul.f32 %v994, %v975
        %v996 = vand.u32 2147483647, %v975
        %vm997 = vcmp.lt.f32.partialorder %v996, 0.0004427343
        %v998 = vsel %vm997, %v995, %v992
        %v999 = vadd.f32 %v977, 1.0
        %v1000 = vlog2.pop %v999
        %v1001 = vmul.f32 %v1000, 0.6931472
        %v1002 = vmul.f32 -0.5, %v977
        %v1003 = vadd.f32 %v1002, 1.0
        %v1004 = vmul.f32 %v1003, %v977
        %v1005 = vand.u32 2147483647, %v977
        %vm1006 = vcmp.lt.f32.partialorder %v1005, 0.0004427343
        %v1007 = vsel %vm1006, %v1004, %v1001
        %v1008 = vadd.f32 %v979, 1.0
        %v1009 = vlog2.pop %v1008
        %v1010 = vmul.f32 %v1009, 0.6931472
        %v1011 = vmul.f32 -0.5, %v979
        %v1012 = vadd.f32 %v1011, 1.0
        %v1013 = vmul.f32 %v1012, %v979
        %v1014 = vand.u32 2147483647, %v979
        %vm1015 = vcmp.lt.f32.partialorder %v1014, 0.0004427343
        %v1016 = vsel %vm1015, %v1013, %v1010
        %v1017 = vadd.f32 %v981, 1.0
        %v1018 = vlog2.pop %v1017
        %v1019 = vmul.f32 %v1018, 0.6931472
        %v1020 = vmul.f32 -0.5, %v981
        %v1021 = vadd.f32 %v1020, 1.0
        %v1022 = vmul.f32 %v1021, %v981
        %v1023 = vand.u32 2147483647, %v981
        %vm1024 = vcmp.lt.f32.partialorder %v1023, 0.0004427343
        %v1025 = vsel %vm1024, %v1022, %v1019
        %v1026 = vadd.f32 %v983, 1.0
        %v1027 = vlog2.pop %v1026
        %v1028 = vmul.f32 %v1027, 0.6931472
        %v1029 = vmul.f32 -0.5, %v983
        %v1030 = vadd.f32 %v1029, 1.0
        %v1031 = vmul.f32 %v1030, %v983
        %v1032 = vand.u32 2147483647, %v983
        %vm1033 = vcmp.lt.f32.partialorder %v1032, 0.0004427343
        %v1034 = vsel %vm1033, %v1031, %v1028
        %v1035 = vadd.f32 %v985, 1.0
        %v1036 = vlog2.pop %v1035
        %v1037 = vmul.f32 %v1036, 0.6931472
        %v1038 = vmul.f32 -0.5, %v985
        %v1039 = vadd.f32 %v1038, 1.0
        %v1040 = vmul.f32 %v1039, %v985
        %v1041 = vand.u32 2147483647, %v985
        %vm1042 = vcmp.lt.f32.partialorder %v1041, 0.0004427343
        %v1043 = vsel %vm1042, %v1040, %v1037
        %v1044 = vadd.f32 %v987, 1.0
        %v1045 = vlog2.pop %v1044
        %v1046 = vmul.f32 %v1045, 0.6931472
        %v1047 = vmul.f32 -0.5, %v987
        %v1048 = vadd.f32 %v1047, 1.0
        %v1049 = vmul.f32 %v1048, %v987
        %v1050 = vand.u32 2147483647, %v987
        %vm1051 = vcmp.lt.f32.partialorder %v1050, 0.0004427343
        %v1052 = vsel %vm1051, %v1049, %v1046
        %v1053 = vadd.f32 %v989, 1.0
        %v1054 = vlog2.pop %v1053
        %v1055 = vmul.f32 %v1054, 0.6931472
        %v1056 = vmul.f32 -0.5, %v989
        %v1057 = vadd.f32 %v1056, 1.0
        %v1058 = vmul.f32 %v1057, %v989
        %v1059 = vand.u32 2147483647, %v989
        %vm1060 = vcmp.lt.f32.partialorder %v1059, 0.0004427343
        %v1061 = vsel %vm1060, %v1058, %v1055
        %v1062 = vadd.f32 %v950, %v998
        %v1063 = vadd.f32 %v951, %v1007
        %v1064 = vadd.f32 %v952, %v1016
        %v1065 = vadd.f32 %v953, %v1025
        %v1066 = vadd.f32 %v954, %v1034
        %v1067 = vadd.f32 %v955, %v1043
        %v1068 = vadd.f32 %v956, %v1052
        %v1069 = vadd.f32 %v957, %v1061
        %1070 = vst.msk [vmem:[%s326] sm:$0xff] %vm706, %v1062
        %1071 = vst.msk [vmem:[%s326 + $0x8] sm:$0xff] %vm706, %v1063
        %1072 = vst.msk [vmem:[%s326 + $0x10] sm:$0xff] %vm706, %v1064
        %1073 = vst.msk [vmem:[%s326 + $0x18] sm:$0xff] %vm706, %v1065
        %1074 = vst.msk [vmem:[%s326 + $0x20] sm:$0xff] %vm706, %v1066
        %1075 = vst.msk [vmem:[%s326 + $0x28] sm:$0xff] %vm706, %v1067
        %1076 = vst.msk [vmem:[%s326 + $0x30] sm:$0xff] %vm706, %v1068
        %1077 = vst.msk [vmem:[%s326 + $0x38] sm:$0xff] %vm706, %v1069
      $region52: #{tpu_custom_call.1} parent=43 // pred_fallthru
        _
      %s1078 = smul.u32 8, %s21
      %p1079 = scmp.lt.s32.totalorder %s1078, 15
      %s1080 = scalar_select %p1079, %s1078, 15
      %s1081 = smul.addr %s1080, 8
      %s1082 = scalar_lea.vmem %s6, %s1081
      // Predicated region
      $region53: #{tpu_custom_call.1} parent=43 // pred_check
        %p1083 = pneg %p193
      $region54: #{tpu_custom_call.1} parent=43 // pred_check_branch
        %1085 = sbr.rel (%p1083) target = $region56
      $region55: #{tpu_custom_call.1} parent=43 // pred_region
        %s1086 = smul.u32 8, %s21
      $region56: #{tpu_custom_call.1} parent=43 // pred_fallthru
        _
    $region44: #{tpu_custom_call.1} parent=5 // pred_fallthru
      _
    %p1087 = scmp.le.s32.totalorder 2, %s12
    // Predicated region
    $region57: #{tpu_custom_call.1} parent=5 // pred_check
      %p1088 = pneg %p1087
    $region58: #{tpu_custom_call.1} parent=5 // pred_check_branch
      %1090 = sbr.rel (%p1088) target = $region60
    $region59: #{tpu_custom_call.1} parent=5 // pred_region
      %s1091 = ssub.s32 %s12, 2
      // Predicated region
      $region61: #{tpu_custom_call.1} parent=59 // pred_check
        %p1092 = pneg %p199
      $region62: #{tpu_custom_call.1} parent=59 // pred_check_branch
        %1094 = sbr.rel (%p1092) target = $region64
      $region63: #{tpu_custom_call.1} parent=59 // pred_region
        %s1095 = smul.u32 8, %s23
        %p1096 = scmp.lt.s32.totalorder %s1095, 15
        %s1097 = scalar_select %p1096, %s1095, 15
        %s1098 = smul.addr %s1097, 8
        %s1099 = scalar_lea.vmem %s6, %s1098
      $region64: #{tpu_custom_call.1} parent=59 // pred_fallthru
        _
    $region60: #{tpu_custom_call.1} parent=5 // pred_fallthru
      _
  $region6: #{tpu_custom_call.1} parent=0 // loop_footer
    %s16 = sadd.s32 1, %s12
  $region7: #{tpu_custom_call.1} parent=0 // loop_footer_branch
    %11 = sbr.rel target = $region3
  $region8: #{tpu_custom_call.1} parent=0 // loop_exit
    _

</llo_original>
